<compile_context>
chip_gen: v7x
topology: tpu7x:2x2x1
jax: 0.10.0
libtpu: 0.0.40
codegen_flags: <defaults>
</compile_context>

<pallas_src>
import functools

import jax
import jax.numpy as jnp
from jax.experimental import pallas as pl
from jax.experimental.pallas import tpu as pltpu

_MiB = 1024 * 1024


def rmsnorm_kernel(x_ref, w_ref, o_ref, *, eps):
    # x_ref: (block_rows, dim); w_ref: (1, dim) pre-cast to the output dtype.
    x_f32 = x_ref[...].astype(jnp.float32)
    ms = jnp.mean(x_f32 * x_f32, axis=-1, keepdims=True)
    inv = jax.lax.rsqrt(ms + eps)
    # PyTorch cast order: normalize in f32, cast back to x.dtype (.type_as(x)),
    # then multiply by weight (promoting to the output dtype).
    # Note: the ragged last block may contain garbage rows; rsqrt on them can
    # be inf/nan but those rows' stores are masked by Pallas, so it's benign.
    normed = (x_f32 * inv).astype(x_ref.dtype)
    o_ref[...] = normed.astype(o_ref.dtype) * w_ref[...]


def _round_up(n, m):
    return ((n + m - 1) // m) * m


def _row_alignment(dtype):
    itemsize = jnp.dtype(dtype).itemsize
    if itemsize >= 4:
        return 8    # f32: one sublane group
    if itemsize == 2:
        return 16   # bf16: packed pairs along sublanes
    return 32       # int8 / fp8: packed quads


def _tpu_params():
    """(vmem_capacity_bytes, num_tensorcores_per_chip) with safe fallbacks."""
    vmem_cap = 128 * _MiB
    num_tcs = 1
    try:
        info = pltpu.get_tpu_info()
        vmem_cap = int(getattr(info, "vmem_capacity_bytes", vmem_cap))
    except Exception:
        pass
    try:
        kind = (getattr(jax.devices()[0], "device_kind", "") or "").lower()
        if "v7" in kind:
            num_tcs = 2  # v7x: 2 TensorCores per chip share the row grid
    except Exception:
        pass
    return vmem_cap, num_tcs


def _vmem_limits(vmem_cap):
    """(data_budget_bytes, vmem_limit_bytes) derived from physical VMEM."""
    if vmem_cap >= 100 * _MiB:        # v5e / v6e: 128 MiB physical VMEM
        vmem_limit = 48 * _MiB
    else:                             # v7x: 64 MiB physical VMEM per TC
        vmem_limit = 40 * _MiB
    data_budget = vmem_limit - 8 * _MiB   # headroom for compiler scratch
    return data_budget, vmem_limit


def _pick_block_rows(rows, dim, dtype, data_budget, min_steps):
    """Largest sublane-aligned row tile that fits VMEM and keeps the grid long."""
    itemsize = jnp.dtype(dtype).itemsize
    align = _row_alignment(dtype)
    rows_rounded = _round_up(rows, align)

    # Pipelined data per row: 2 double-buffered input tiles + 2 double-buffered
    # output tiles (x.dtype-sized) + ~2 f32 intermediates inside the body.
    per_row = dim * (4 * itemsize + 8)
    br = max(align, data_budget // max(per_row, 1))
    br = (br // align) * align
    # Roofline is flat past ~512 rows; cap at 1024 to keep VMEM headroom and
    # pipeline fill/drain short.
    br = min(br, 1024)

    # Keep the grid at least `min_steps` long so the BlockSpec pipeline can
    # overlap prefetch(i+1)/compute(i)/writeback(i-1) and, on v7x, both
    # TensorCores get work — but never shrink a block below ~256 rows.
    steps_cap = _round_up(max(1, -(-rows // min_steps)), align)
    step_floor = min(256, rows_rounded)
    br = min(br, max(steps_cap, step_floor))

    br = min(br, rows_rounded)
    return max(br, align)


def rmsnorm(x, weight, eps=1e-6, block_rows=None, donate_x=False):
    orig_shape = x.shape
    dim = orig_shape[-1]
    rows = 1
    for s in orig_shape[:-1]:
        rows *= s

    # PyTorch: the normalized tensor is cast back to x.dtype, then multiplied
    # by weight — the result dtype follows standard type promotion (e.g. fp32
    # gamma with bf16 activations yields an fp32 output).
    out_dtype = jnp.promote_types(x.dtype, weight.dtype)

    x2d = x.reshape(rows, dim)
    w2d = weight.reshape(1, dim).astype(out_dtype)

    vmem_cap, num_tcs = _tpu_params()
    data_budget, vmem_limit = _vmem_limits(vmem_cap)
    if block_rows is None:
        block_rows = _pick_block_rows(rows, dim, x.dtype, data_budget,
                                      min_steps=4 * num_tcs)

    grid = (pl.cdiv(rows, block_rows),)

    # TODO(synk): if dim is not a multiple of 128, output stores lower to
    # masked vst.msk; folding rows into the lane dim would need a segmented
    # reduction and is not implemented (standard LLM hidden dims are fine).

    in_sz = jnp.dtype(x.dtype).itemsize
    out_sz = jnp.dtype(out_dtype).itemsize
    cost = pl.CostEstimate(
        flops=4 * rows * dim,
        transcendentals=rows,
        bytes_accessed=rows * dim * (in_sz + out_sz) + dim * out_sz,
    )

    aliases = {}
    if donate_x and jnp.dtype(out_dtype) == jnp.dtype(x.dtype):
        aliases = {0: 0}  # donate x2d into the output buffer

    out = pl.pallas_call(
        functools.partial(rmsnorm_kernel, eps=eps),
        out_shape=jax.ShapeDtypeStruct((rows, dim), out_dtype),
        grid_spec=pltpu.PrefetchScalarGridSpec(
            num_scalar_prefetch=0,
            grid=grid,
            in_specs=[
                pl.BlockSpec((block_rows, dim), lambda i: (i, 0)),
                pl.BlockSpec((1, dim), lambda i: (0, 0)),  # weight stays resident
            ],
            out_specs=pl.BlockSpec((block_rows, dim), lambda i: (i, 0)),
        ),
        compiler_params=pltpu.CompilerParams(
            dimension_semantics=("parallel",),
            vmem_limit_bytes=vmem_limit,
        ),
        cost_estimate=cost,
        input_output_aliases=aliases,
    )(x2d, w2d)

    return out.reshape(orig_shape[:-1] + (dim,)) if out_dtype == x.dtype \
        else out.reshape(orig_shape[:-1] + (dim,))


def rmsnorm_ref(x, weight, eps=1e-6):
    x_f32 = x.astype(jnp.float32)
    ms = jnp.mean(x_f32 * x_f32, axis=-1, keepdims=True)
    normed = (x_f32 * jax.lax.rsqrt(ms + eps)).astype(x.dtype)
    return normed * weight  # promotes like PyTorch


if __name__ == "__main__":
    key = jax.random.PRNGKey(0)
    kx, kw, kx2, kx3 = jax.random.split(key, 4)

    # Module-consistent small shapes: (batch, seq, hidden), weight init = ones.
    batch, seq, hidden = 2, 8, 32
    x = jax.random.normal(kx, (batch, seq, hidden), dtype=jnp.float32)
    weight = jnp.ones((hidden,), dtype=jnp.float32)   # nn.Parameter(torch.ones(dim))

    out = jax.block_until_ready(rmsnorm(x, weight))
    ref = rmsnorm_ref(x, weight)
    assert out.shape == x.shape and out.dtype == ref.dtype
    assert jnp.allclose(out, ref, atol=1e-5, rtol=1e-5)

    # Ragged (rows % block_rows != 0) path, non-unit weight, donated input.
    x2 = jax.random.normal(kx2, (3, 5, hidden), dtype=jnp.float32)
    w2 = jax.random.normal(kw, (hidden,), dtype=jnp.float32)
    out2 = jax.block_until_ready(rmsnorm(x2, w2, donate_x=True))
    ref2 = rmsnorm_ref(x2, w2)
    assert out2.shape == x2.shape
    assert jnp.allclose(out2, ref2, atol=1e-5, rtol=1e-5)

    # bf16 activations with fp32 gamma: output promotes to fp32 (PyTorch behavior).
    x3 = jax.random.normal(kx3, (batch, seq, hidden), dtype=jnp.bfloat16)
    out3 = jax.block_until_ready(rmsnorm(x3, w2))
    ref3 = rmsnorm_ref(x3, w2)
    assert out3.dtype == jnp.float32 and out3.shape == x3.shape
    assert jnp.allclose(out3, ref3, atol=2e-2, rtol=2e-2)

    print("KERNEL_OK")
</pallas_src>

<mosaic_0001>
module attributes {stable_mosaic.version = 11 : i64} {
  func.func @rmsnorm_kernel(%arg0: i32, %arg1: memref<16x32xf32, #tpu.memory_space<vmem>>, %arg2: memref<1x32xf32, #tpu.memory_space<vmem>>, %arg3: memref<16x32xf32, #tpu.memory_space<vmem>>) attributes {dimension_semantics = [#tpu.dimension_semantics<parallel>], iteration_bounds = array<i64: 1>, scalar_prefetch = 0 : i64, scratch_operands = 0 : i64, tpu.core_type = #tpu.core_type<tc>, window_params = [{transform_indices = @transform_0, window_bounds = array<i64: 16, 32>}, {pipeline_mode = #tpu.pipeline_mode<synchronous>, transform_indices = @transform_1, window_bounds = array<i64: 1, 32>}, {transform_indices = @transform_2, window_bounds = array<i64: 16, 32>}]} {
    %c0 = arith.constant 0 : index
    %c0_0 = arith.constant 0 : index
    %0 = vector.load %arg1[%c0, %c0_0] : memref<16x32xf32, #tpu.memory_space<vmem>>, vector<16x32xf32>
    %1 = arith.mulf %0, %0 : vector<16x32xf32>
    %cst = arith.constant dense<0.000000e+00> : vector<16xf32>
    %2 = vector.multi_reduction <add>, %1, %cst [1] : vector<16x32xf32> to vector<16xf32>
    %3 = vector.shape_cast %2 : vector<16xf32> to vector<16x1xf32>
    %cst_1 = arith.constant 3.200000e+01 : f32
    %4 = vector.broadcast %cst_1 : f32 to vector<16x1xf32>
    %5 = arith.divf %3, %4 : vector<16x1xf32>
    %cst_2 = arith.constant 9.99999997E-7 : f32
    %6 = vector.broadcast %cst_2 : f32 to vector<16x1xf32>
    %7 = arith.addf %5, %6 : vector<16x1xf32>
    %8 = math.rsqrt %7 : vector<16x1xf32>
    %9 = vector.broadcast %8 : vector<16x1xf32> to vector<16x32xf32>
    %10 = arith.mulf %0, %9 : vector<16x32xf32>
    %c0_3 = arith.constant 0 : index
    %c0_4 = arith.constant 0 : index
    %11 = vector.load %arg2[%c0_3, %c0_4] : memref<1x32xf32, #tpu.memory_space<vmem>>, vector<1x32xf32>
    %12 = vector.broadcast %11 : vector<1x32xf32> to vector<16x32xf32>
    %13 = arith.mulf %10, %12 : vector<16x32xf32>
    %c0_5 = arith.constant 0 : index
    %c0_6 = arith.constant 0 : index
    %14 = vector.load %arg3[%c0_5, %c0_6] : memref<16x32xf32, #tpu.memory_space<vmem>>, vector<16x32xf32>
    tpu.vector_store %arg3[%c0_5, %c0_6], %13 {strides = array<i32>} : memref<16x32xf32, #tpu.memory_space<vmem>>, vector<16x32xf32>,
    return
  }
  func.func @transform_0(%arg0: i32) -> (i32, i32) {
    %c0_i32 = arith.constant 0 : i32
    %c0_i32_0 = arith.constant 0 : i32
    return %arg0, %c0_i32 : i32, i32
  }
  func.func @transform_1(%arg0: i32) -> (i32, i32) {
    %c0_i32 = arith.constant 0 : i32
    %c0_i32_0 = arith.constant 0 : i32
    %c0_i32_1 = arith.constant 0 : i32
    return %c0_i32, %c0_i32_0 : i32, i32
  }
  func.func @transform_2(%arg0: i32) -> (i32, i32) {
    %c0_i32 = arith.constant 0 : i32
    %c0_i32_0 = arith.constant 0 : i32
    return %arg0, %c0_i32 : i32, i32
  }
}

</mosaic_0001>

<llo_original>
// kernel: tpu_custom_call.1
$region0: #{tpu_custom_call.1}
  #allocation0 [shape = 'u32[]', space=smem, size = 0x4, offset = 0x4, fixed_abs, tag = 'smem constant byte address 0x4 - core index']
  #allocation1 [shape = 'u32[144,128]{1,0:T(1,128)}', space=vmem, size = 0x12000, scoped, tag = 'internal scratch']
  %s0 = inlined_call_operand.hbm [shape: f32[16,32], index: 0, kind: input, shape index: {}]
  %s1 = inlined_call_operand.vmem [shape: f32[1,32], index: 1, kind: input, shape index: {}]
  %s2 = inlined_call_operand.hbm [shape: f32[16,32], index: 2, kind: output, shape index: {}]
  %s3 = sld [smem:[#allocation0]]
  $region22: #{tpu_custom_call.1} parent=0
    _
  %s5 = ssub.s32 1, %s3
  %s6 = scalar_select 0, %s5, %s3
  $region1: #{tpu_custom_call.1} parent=0
    #allocation2 [shape = 'u8[8192]{0}', space=vmem, size = 0x2000, scoped, tag = 'input window, operand 0, single buffered']
    #allocation3 [shape = 's32[1]{0}', space=sflag, size = 0x4, scoped, tag = 'scoped memory for tpu_custom_call.1']
    #allocation4 [shape = 's32[1]{0}', space=sflag, size = 0x4, scoped, tag = 'scoped memory for tpu_custom_call.1']
    #allocation5 [shape = 'u8[8192]{0}', space=vmem, size = 0x2000, scoped, tag = 'output window, operand 0, single buffered']
    %7 = vsyncpa [#allocation3], 0
    %8 = vsyncpa [#allocation4], 0
    // Predicated region
    $region2: #{tpu_custom_call.1} parent=1 // pred_check
      _
    $region3: #{tpu_custom_call.1} parent=1 // pred_check_branch
      %10 = sbr.rel (0) target = $region5
    $region4: #{tpu_custom_call.1} parent=1 // pred_region
      %s12 = ssub.s32 256, 256
      %13 = vsyncadd [#allocation3], %s12
      %s14 = sshll.u32 [#allocation2], 4
      %s15 = int_to_ptr.vmem [resolvable:$true] %s14
      %20 = dma.hbm_to_vmem [thread:$0]  %s0, 256, %s15, [#allocation3], 128, 128, 8
    $region5: #{tpu_custom_call.1} parent=1 // pred_fallthru
      _
    // Predicated region
    $region6: #{tpu_custom_call.1} parent=1 // pred_check
      _
    $region7: #{tpu_custom_call.1} parent=1 // pred_check_branch
      %22 = sbr.rel (0) target = $region9
    $region8: #{tpu_custom_call.1} parent=1 // pred_region
      _
    $region9: #{tpu_custom_call.1} parent=1 // pred_fallthru
      _
    // Predicated region
    $region10: #{tpu_custom_call.1} parent=1 // pred_check
      _
    $region11: #{tpu_custom_call.1} parent=1 // pred_check_branch
      %24 = sbr.rel (0) target = $region13
    $region12: #{tpu_custom_call.1} parent=1 // pred_region
      %25 = dma.done [#allocation3], 256
    $region13: #{tpu_custom_call.1} parent=1 // pred_fallthru
      _
    %v26 = vld [vmem:[#allocation2] sm:$0xff]
    %v27 = vld [vmem:[#allocation2 + $0x8] sm:$0xff]
    %v28 = vmul.f32 %v26, %v26
    %v29 = vmul.f32 %v27, %v27
    %vm30 = vcmask 261120
    %v31 = vsel %vm30, %v28, 0.0
    %32 = vadd.xlane.f32.xlu0 %v31
    %v33 = vpop.xlane.xlu0 %32
    %v34 = vsel %vm30, %v29, 0.0
    %35 = vadd.xlane.f32.xlu0 %v34
    %v36 = vpop.xlane.xlu0 %35
    %v37 = vrcp.pop 32.0
    %v38 = vmul.f32 %v33, %v37
    %v39 = vmul.f32 %v36, %v37
    %v40 = vadd.f32 %v38, 1e-06
    %v41 = vadd.f32 %v39, 1e-06
    %v42 = vrsqrt.pop %v40
    %v43 = vrsqrt.pop %v41
    %v44 = vmul.f32 %v26, %v42
    %v45 = vmul.f32 %v27, %v43
    %v46 = vld [vmem:[%s1] sm:$0x1]
    %v48 = vlaneseq
    %v49 = vshrl.u32 %v48, 7
    %v50 = vsub.s32 0, %v49
    %v51 = vrot.slane %v46, %v50
    %v53 = vmul.f32 %v44, %v51
    %v54 = vmul.f32 %v45, %v51
    %55 = vst.msk [vmem:[#allocation5] sm:$0xff] %vm30, %v53
    %56 = vst.msk [vmem:[#allocation5 + $0x8] sm:$0xff] %vm30, %v54
    // Predicated region
    $region14: #{tpu_custom_call.1} parent=1 // pred_check
      _
    $region15: #{tpu_custom_call.1} parent=1 // pred_check_branch
      %58 = sbr.rel (0) target = $region17
    $region16: #{tpu_custom_call.1} parent=1 // pred_region
      %s60 = ssub.s32 256, 256
      %61 = vsyncadd [#allocation4], %s60
      %s62 = sshll.u32 [#allocation5], 4
      %s63 = int_to_ptr.vmem [resolvable:$true] %s62
      %68 = dma.vmem_to_hbm [thread:$0]  %s63, 256, %s2, [#allocation4], 128, 128, 8
    $region17: #{tpu_custom_call.1} parent=1 // pred_fallthru
      _
    // Predicated region
    $region18: #{tpu_custom_call.1} parent=1 // pred_check
      _
    $region19: #{tpu_custom_call.1} parent=1 // pred_check_branch
      %70 = sbr.rel (0) target = $region21
    $region20: #{tpu_custom_call.1} parent=1 // pred_region
      %71 = dma.done [#allocation4], 256
    $region21: #{tpu_custom_call.1} parent=1 // pred_fallthru
      _
    %72 = vsyncpa [#allocation3], 1
    %73 = vsyncpa [#allocation4], 1

</llo_original>
